<compile_context>
chip_gen: v6e
topology: v6e:2x2x1
jax: 0.10.0
libtpu: 0.0.40
codegen_flags: <defaults>
</compile_context>

<pallas_src>
import jax
import jax.numpy as jnp
from jax import lax
from jax.experimental import pallas as pl
from jax.experimental.pallas import tpu as pltpu

SCALE = 30.0
LAMDA = 70.0


def _adam_softmax_kernel(labels_ref, margin_ref, feats_ref, kernel_ref, out_ref):
    """Computes one (TB, TC) tile of the AdaptiveFace logits."""
    j = pl.program_id(1)                       # C-tile index
    tc = out_ref.shape[1]

    # cos_theta = clamp(feats @ K_norm, -1, 1).  Column normalization of K is
    # pre-folded into kernel_ref in the wrapper; f32 accumulation on the MXU.
    cos = jnp.dot(feats_ref[...], kernel_ref[...],
                  preferred_element_type=jnp.float32)         # (TB, TC) f32
    cos = jnp.clip(cos, -1.0, 1.0)

    # Grid-invariant one-hot: shift the tiny (TB, 1) labels by the tile
    # origin instead of offsetting the full (TB, TC) iota each step.
    local_labels = labels_ref[...] - j * tc                   # (TB, 1) int32
    col = lax.broadcasted_iota(jnp.int32, cos.shape, 1)       # (TB, TC)
    is_label = col == local_labels                            # (TB, TC) bool

    # Subtract the per-row margin only at the label column, then scale.
    out = (cos - jnp.where(is_label, margin_ref[...], 0.0)) * SCALE
    out_ref[...] = out.astype(out_ref.dtype)


def _vmem_capacity_bytes():
    try:
        return int(pltpu.get_tpu_info().vmem_capacity_bytes)
    except Exception:
        return 64 * 1024 * 1024   # conservative fallback (v7x per-TC size)


def adam_softmax(feats, labels, kernel, adam, *,
                 mxu_dtype=jnp.bfloat16, out_dtype=jnp.float32,
                 block_b=None, block_c=None):
    """Pallas forward of Adam_Softmax.

    feats:  (B, D) float32
    labels: (B,)   int32
    kernel: (D, C) float32
    adam:   (1, C) float32
    returns (logits (B, C) out_dtype, lamda * Lm (1,) float32)
    """
    B, D = feats.shape
    Dk, C = kernel.shape
    assert Dk == D

    # Generation-aware VMEM budget: 3/4 of per-TC capacity, capped at 96 MiB
    # (-> ~48 MiB on v7x's 64 MiB, 96 MiB on v5e/v6e's 128 MiB).
    vmem_cap = _vmem_capacity_bytes()
    vmem_limit = min((vmem_cap * 3) // 4, 96 * 1024 * 1024)

    if block_b is None:
        block_b = 512                         # big B-tile: fewer (D,C) re-reads
    if block_c is None:
        block_c = 4096 if vmem_cap >= 96 * 1024 * 1024 else 2048

    # Inverse column norms (matches F.normalize(kernel, dim=0), eps=1e-12),
    # folded into the MXU-dtype cast of the class kernel (no extra HBM pass).
    k32 = kernel.astype(jnp.float32)
    inv_norm = lax.rsqrt(
        jnp.maximum(jnp.sum(k32 * k32, axis=0, keepdims=True), 1e-24))  # (1, C)
    kernel_m = (k32 * inv_norm).astype(mxu_dtype)
    feats_m = feats.astype(mxu_dtype)

    # Clamp adam once; per-row margin = adam at each row's label column.
    adam_c = jnp.clip(adam.astype(jnp.float32), 0.0, 1.0)               # (1, C)
    labels_i = labels.astype(jnp.int32)
    margin = jnp.take(adam_c[0], labels_i)[:, None]                     # (B, 1)
    labels2d = labels_i.reshape(B, 1)

    # Tile sizes: full dim when small (always a legal block), otherwise
    # 8/128-aligned tiles.  Keep >= 2 C-tiles on medium shapes so both v7x
    # TensorCores get work (both grid axes are "parallel").
    tb = B if B <= block_b else block_b          # block_b is a multiple of 8
    tc = C if C <= block_c else block_c          # block_c is a multiple of 128
    if B <= tb and C <= tc and C >= 256 and C % 256 == 0:
        tc = C // 2
    grid = (pl.cdiv(B, tb), pl.cdiv(C, tc))

    in_itemsize = jnp.dtype(mxu_dtype).itemsize
    out_itemsize = jnp.dtype(out_dtype).itemsize
    cost = pl.CostEstimate(
        flops=2 * B * D * C,
        transcendentals=0,
        bytes_accessed=(grid[0] * D * C * in_itemsize   # class kernel, per B-tile
                        + B * D * in_itemsize           # feats
                        + B * C * out_itemsize          # logits
                        + B * 8))                       # labels + margins

    out = pl.pallas_call(
        _adam_softmax_kernel,
        out_shape=jax.ShapeDtypeStruct((B, C), out_dtype),
        grid=grid,
        in_specs=[
            pl.BlockSpec((tb, 1), lambda i, j: (i, 0)),    # labels  (per B-tile)
            pl.BlockSpec((tb, 1), lambda i, j: (i, 0)),    # per-row margin
            pl.BlockSpec((tb, D), lambda i, j: (i, 0)),    # feats
            pl.BlockSpec((D, tc), lambda i, j: (0, j)),    # normalized class kernel
        ],
        out_specs=pl.BlockSpec((tb, tc), lambda i, j: (i, j)),
        compiler_params=pltpu.CompilerParams(
            dimension_semantics=("parallel", "parallel"),
            vmem_limit_bytes=vmem_limit),
        cost_estimate=cost,
    )(labels2d, margin, feats_m, kernel_m)

    # Lm = -sum(clamp(adam, 0, 1)) / num_class + 1 ; trivial O(C) reduction,
    # kept in plain JAX so the tiled Pallas grid stays accumulation-free.
    lm = LAMDA * (-jnp.sum(adam_c, axis=1) / C + 1.0)                   # (1,)
    return out, lm


def _reference(feats, labels, kernel, adam):
    # Pure-JAX reference matching the PyTorch forward (f32 throughout).
    kn = kernel / jnp.maximum(jnp.linalg.norm(kernel, axis=0, keepdims=True), 1e-12)
    cos = jnp.clip(jnp.dot(feats, kn, precision=lax.Precision.HIGHEST), -1.0, 1.0)
    adam_c = jnp.clip(adam, 0.0, 1.0)
    margin = adam_c[0, labels][:, None]
    onehot = jax.nn.one_hot(labels, kernel.shape[1], dtype=bool)
    out = jnp.where(onehot, cos - margin, cos) * SCALE
    lm = LAMDA * (-jnp.sum(adam_c, axis=1) / kernel.shape[1] + 1.0)
    return out, lm


if __name__ == "__main__":
    # Small, deterministic synthetic setup.
    B, feat_dim, num_class = 8, 128, 256
    key = jax.random.PRNGKey(0)
    k_feats, k_kernel, k_adam, k_labels = jax.random.split(key, 4)

    feats = jax.random.normal(k_feats, (B, feat_dim), dtype=jnp.float32)
    # Mimic PyTorch init: uniform(-1, 1) (column renorm is a no-op after the
    # in-forward normalization), adam ~ uniform(0.3, 0.4).
    kernel = jax.random.uniform(k_kernel, (feat_dim, num_class),
                                minval=-1.0, maxval=1.0, dtype=jnp.float32)
    adam = jax.random.uniform(k_adam, (1, num_class),
                              minval=0.3, maxval=0.4, dtype=jnp.float32)
    labels = jax.random.randint(k_labels, (B,), 0, num_class, dtype=jnp.int32)

    ref_out, ref_lm = _reference(feats, labels, kernel, adam)

    # f32-fed MXU path, forced to small C-tiles (grid=(1, 2)) to exercise the
    # per-tile label-offset logic.  Tolerance allows for the MXU's internal
    # f32 decomposition while staying far below the SCALE*margin (~10) signal,
    # so any indexing / margin bug is still caught.
    out32, lm32 = adam_softmax(feats, labels, kernel, adam,
                               mxu_dtype=jnp.float32, block_c=128)
    out32, lm32 = jax.block_until_ready((out32, lm32))
    assert jnp.allclose(out32, ref_out, atol=5e-2, rtol=1e-2), "f32 logits mismatch"
    assert jnp.allclose(lm32, ref_lm, atol=1e-5, rtol=1e-5), "Lm mismatch"

    # Default production path: bf16 operands on the MXU with f32 accumulation
    # (inv_norm folded into the bf16 cast).  bf16 quantization is amplified by
    # SCALE=30, so the tolerance is correspondingly looser.
    out16, lm16 = adam_softmax(feats, labels, kernel, adam)
    out16, lm16 = jax.block_until_ready((out16, lm16))
    assert jnp.allclose(out16, ref_out, atol=1.0, rtol=2e-2), "bf16 logits mismatch"
    assert jnp.allclose(lm16, ref_lm, atol=1e-5, rtol=1e-5), "Lm mismatch"

    print("KERNEL_OK")
</pallas_src>

<mosaic_0001>
module attributes {stable_mosaic.version = 11 : i64} {
  func.func @_adam_softmax_kernel(%arg0: i32, %arg1: i32, %arg2: memref<8x1xi32, #tpu.memory_space<vmem>>, %arg3: memref<8x1xf32, #tpu.memory_space<vmem>>, %arg4: memref<8x128xf32, #tpu.memory_space<vmem>>, %arg5: memref<128x128xf32, #tpu.memory_space<vmem>>, %arg6: memref<8x128xf32, #tpu.memory_space<vmem>>) attributes {dimension_semantics = [#tpu.dimension_semantics<parallel>, #tpu.dimension_semantics<parallel>], iteration_bounds = array<i64: 1, 2>, scalar_prefetch = 0 : i64, scratch_operands = 0 : i64, tpu.core_type = #tpu.core_type<tc>, window_params = [{transform_indices = @transform_0, window_bounds = array<i64: 8, 1>}, {transform_indices = @transform_1, window_bounds = array<i64: 8, 1>}, {transform_indices = @transform_2, window_bounds = array<i64: 8, 128>}, {transform_indices = @transform_3, window_bounds = array<i64: 128, 128>}, {transform_indices = @transform_4, window_bounds = array<i64: 8, 128>}]} {
    %c0 = arith.constant 0 : index
    %c0_0 = arith.constant 0 : index
    %0 = vector.load %arg4[%c0, %c0_0] : memref<8x128xf32, #tpu.memory_space<vmem>>, vector<8x128xf32>
    %c0_1 = arith.constant 0 : index
    %c0_2 = arith.constant 0 : index
    %1 = vector.load %arg5[%c0_1, %c0_2] : memref<128x128xf32, #tpu.memory_space<vmem>>, vector<128x128xf32>
    %cst = arith.constant dense<0.000000e+00> : vector<8x128xf32>
    %2 = tpu.matmul %0, %1, %cst {dimension_numbers = #tpu.dot_dimension_numbers<[1], [0], [0], [1], [0, 0, 1, 1], [], []>} : vector<8x128xf32>, vector<128x128xf32>, vector<8x128xf32> -> vector<8x128xf32>
    %cst_3 = arith.constant -1.000000e+00 : f32
    %cst_4 = arith.constant 1.000000e+00 : f32
    %3 = vector.broadcast %cst_3 : f32 to vector<8x128xf32>
    %4 = arith.maximumf %3, %2 : vector<8x128xf32>
    %5 = vector.broadcast %cst_4 : f32 to vector<8x128xf32>
    %6 = arith.minimumf %5, %4 : vector<8x128xf32>
    %c0_5 = arith.constant 0 : index
    %c0_6 = arith.constant 0 : index
    %7 = vector.load %arg2[%c0_5, %c0_6] : memref<8x1xi32, #tpu.memory_space<vmem>>, vector<8x1xi32>
    %c128_i32 = arith.constant 128 : i32
    %8 = arith.muli %arg1, %c128_i32 : i32
    %9 = vector.broadcast %8 : i32 to vector<8x1xi32>
    %10 = arith.subi %7, %9 : vector<8x1xi32>
    %11 = tpu.iota {dimensions = array<i32: 1>} : vector<8x128xi32>
    %12 = vector.broadcast %10 : vector<8x1xi32> to vector<8x128xi32>
    %13 = arith.cmpi eq, %11, %12 : vector<8x128xi32>
    %c0_7 = arith.constant 0 : index
    %c0_8 = arith.constant 0 : index
    %14 = vector.load %arg3[%c0_7, %c0_8] : memref<8x1xf32, #tpu.memory_space<vmem>>, vector<8x1xf32>
    %cst_9 = arith.constant 0.000000e+00 : f32
    %15 = vector.shape_cast %14 : vector<8x1xf32> to vector<8x1xf32>
    %16 = vector.broadcast %15 : vector<8x1xf32> to vector<8x128xf32>
    %17 = vector.broadcast %cst_9 : f32 to vector<8x128xf32>
    %18 = arith.select %13, %16, %17 : vector<8x128xi1>, vector<8x128xf32>
    %19 = arith.subf %6, %18 : vector<8x128xf32>
    %cst_10 = arith.constant 3.000000e+01 : f32
    %20 = vector.broadcast %cst_10 : f32 to vector<8x128xf32>
    %21 = arith.mulf %19, %20 : vector<8x128xf32>
    %c0_11 = arith.constant 0 : index
    %c0_12 = arith.constant 0 : index
    %22 = vector.load %arg6[%c0_11, %c0_12] : memref<8x128xf32, #tpu.memory_space<vmem>>, vector<8x128xf32>
    tpu.vector_store %arg6[%c0_11, %c0_12], %21 {strides = array<i32>} : memref<8x128xf32, #tpu.memory_space<vmem>>, vector<8x128xf32>,
    return
  }
  func.func @transform_0(%arg0: i32, %arg1: i32) -> (i32, i32) {
    %c0_i32 = arith.constant 0 : i32
    %c0_i32_0 = arith.constant 0 : i32
    return %arg0, %c0_i32 : i32, i32
  }
  func.func @transform_1(%arg0: i32, %arg1: i32) -> (i32, i32) {
    %c0_i32 = arith.constant 0 : i32
    %c0_i32_0 = arith.constant 0 : i32
    return %arg0, %c0_i32 : i32, i32
  }
  func.func @transform_2(%arg0: i32, %arg1: i32) -> (i32, i32) {
    %c0_i32 = arith.constant 0 : i32
    %c0_i32_0 = arith.constant 0 : i32
    return %arg0, %c0_i32 : i32, i32
  }
  func.func @transform_3(%arg0: i32, %arg1: i32) -> (i32, i32) {
    %c0_i32 = arith.constant 0 : i32
    %c0_i32_0 = arith.constant 0 : i32
    return %c0_i32, %arg1 : i32, i32
  }
  func.func @transform_4(%arg0: i32, %arg1: i32) -> (i32, i32) {
    %c0_i32 = arith.constant 0 : i32
    return %arg0, %arg1 : i32, i32
  }
}

</mosaic_0001>

<llo_original>
// kernel: tpu_custom_call.1
$region0: #{tpu_custom_call.1}
  #allocation0 [shape = 'u32[]', space=smem, size = 0x4, offset = 0x4, fixed_abs, tag = 'smem constant byte address 0x4 - core index']
  #allocation1 [shape = 'u32[144,128]{1,0:T(1,128)}', space=vmem, size = 0x12000, scoped, tag = 'internal scratch']
  %s0 = inlined_call_operand.vmem [shape: s32[8,1], index: 0, kind: input, shape index: {}]
  %s1 = inlined_call_operand.vmem [shape: f32[8,1], index: 1, kind: input, shape index: {}]
  %s2 = inlined_call_operand.vmem [shape: f32[8,128], index: 2, kind: input, shape index: {}]
  %s3 = inlined_call_operand.hbm [shape: f32[128,256], index: 3, kind: input, shape index: {}]
  %s4 = inlined_call_operand.hbm [shape: f32[8,256], index: 4, kind: output, shape index: {}]
  %s5 = sld [smem:[#allocation0]]
  $region53: #{tpu_custom_call.1} parent=0
    _
  %s7 = ssub.s32 1, %s5
  %s8 = scalar_select 0, %s7, %s5
  $region1: #{tpu_custom_call.1} parent=0
    #allocation2 [shape = 'u8[131072]{0}', space=vmem, size = 0x20000, scoped, tag = 'input window, operand 3']
    #allocation3 [shape = 's32[2]{0}', space=sflag, size = 0x8, scoped, tag = 'scoped memory for tpu_custom_call.1']
    #allocation4 [shape = 's32[2]{0}', space=sflag, size = 0x8, scoped, tag = 'scoped memory for tpu_custom_call.1']
    #allocation5 [shape = 'u8[8192]{0}', space=vmem, size = 0x2000, scoped, tag = 'output window, operand 0']
    %9 = vsyncpa [#allocation3], 0
    %s10 = scalar_lea.sflag [#allocation3], 1
    %11 = vsyncpa %s10, 0
    %12 = vsyncpa [#allocation4], 0
    %s13 = scalar_lea.sflag [#allocation4], 1
    %14 = vsyncpa %s13, 0
    loop: start=0, step=1, limit=4
    $region2: #{tpu_custom_call.1} parent=1 // loop_pre_header
      _
    $region3: #{tpu_custom_call.1} parent=1 // loop_header
      %s16 = sphi 0, %s20
      %p17 = scmp.ge.s32.totalorder %s16, 4
      %s23 = sphi 0, %s35
      %s24 = sphi 0, %s31
      %s25 = sphi 0, %s23
      %s26 = sphi 0, %s24
      %s27 = sphi 0, %s25
      %s28 = sphi 0, %s26
      %s38 = sphi 0, %s40
      %s41 = sphi 0, %s38
      %s42 = sphi 0, %s41
      %s58 = sphi 0, %s42
      %s64 = sphi 0, %s66
      %s67 = sphi 0, %s64
      %s68 = sphi 0, %s67
      %s84 = sphi 0, %s68
      %s90 = sphi 0, %s92
      %s93 = sphi 0, %s90
      %s94 = sphi 0, %s93
      %s110 = sphi 0, %s94
      %s116 = sphi 0, %s118
      %s119 = sphi 0, %s116
      %s120 = sphi 0, %s119
      %s136 = sphi 0, %s120
      %s144 = sphi 0, %s146
      %s147 = sphi 0, %s144
      %s148 = sphi 0, %s147
      %s164 = sphi 0, %s148
    $region4: #{tpu_custom_call.1} parent=1 // loop_header_branch
      %19 = sbr.rel (%p17) target = $region8
    $region5: #{tpu_custom_call.1} parent=1 // loop_body
      %s21 = ssub.s32 %s16, 1
      %s22 = ssub.s32 %s16, 2
      %s29 = sadd.s32 1, %s24
      %p30 = scmp.ge.s32.totalorder %s29, 2
      %s31 = scalar_select %p30, 0, %s29
      %s32 = sadd.s32 1, %s23
      %s33 = scalar_select %p30, %s32, %s23
      %p34 = scmp.ge.s32.totalorder %s33, 1
      %s35 = scalar_select %p34, 0, %s33
      %s36 = ssub.s32 %s23, %s35
      %p37 = scmp.eq.s32.totalorder %s36, 0
      %s39 = sadd.s32 %s38, 1
      %s40 = scalar_select %p37, %s38, %s39
      %p43 = pneg %p37
      %p44 = scmp.eq.s32.totalorder %s16, 1
      %p45 = por %p43, %p44
      %p46 = scmp.ne.s32.totalorder %s38, %s41
      %p47 = scmp.eq.s32.totalorder %s16, 0
      %p48 = por %p46, %p47
      %p49 = scmp.ne.s32.totalorder %s38, %s41
      %p50 = scmp.eq.s32.totalorder %s21, 1
      %p51 = por %p49, %p50
      %p52 = scmp.ne.s32.totalorder %s41, %s42
      %p53 = scmp.eq.s32.totalorder %s21, 0
      %p54 = por %p52, %p53
      %p55 = scmp.ne.s32.totalorder %s41, %s42
      %p56 = scmp.eq.s32.totalorder %s22, 1
      %p57 = por %p55, %p56
      %p59 = scmp.ne.s32.totalorder %s42, %s58
      %p60 = scmp.eq.s32.totalorder %s22, 0
      %p61 = por %p59, %p60
      %s62 = ssub.s32 %s23, %s35
      %p63 = scmp.eq.s32.totalorder %s62, 0
      %s65 = sadd.s32 %s64, 1
      %s66 = scalar_select %p63, %s64, %s65
      %p69 = pneg %p63
      %p70 = scmp.eq.s32.totalorder %s16, 1
      %p71 = por %p69, %p70
      %p72 = scmp.ne.s32.totalorder %s64, %s67
      %p73 = scmp.eq.s32.totalorder %s16, 0
      %p74 = por %p72, %p73
      %p75 = scmp.ne.s32.totalorder %s64, %s67
      %p76 = scmp.eq.s32.totalorder %s21, 1
      %p77 = por %p75, %p76
      %p78 = scmp.ne.s32.totalorder %s67, %s68
      %p79 = scmp.eq.s32.totalorder %s21, 0
      %p80 = por %p78, %p79
      %p81 = scmp.ne.s32.totalorder %s67, %s68
      %p82 = scmp.eq.s32.totalorder %s22, 1
      %p83 = por %p81, %p82
      %p85 = scmp.ne.s32.totalorder %s68, %s84
      %p86 = scmp.eq.s32.totalorder %s22, 0
      %p87 = por %p85, %p86
      %s88 = ssub.s32 %s23, %s35
      %p89 = scmp.eq.s32.totalorder %s88, 0
      %s91 = sadd.s32 %s90, 1
      %s92 = scalar_select %p89, %s90, %s91
      %p95 = pneg %p89
      %p96 = scmp.eq.s32.totalorder %s16, 1
      %p97 = por %p95, %p96
      %p98 = scmp.ne.s32.totalorder %s90, %s93
      %p99 = scmp.eq.s32.totalorder %s16, 0
      %p100 = por %p98, %p99
      %p101 = scmp.ne.s32.totalorder %s90, %s93
      %p102 = scmp.eq.s32.totalorder %s21, 1
      %p103 = por %p101, %p102
      %p104 = scmp.ne.s32.totalorder %s93, %s94
      %p105 = scmp.eq.s32.totalorder %s21, 0
      %p106 = por %p104, %p105
      %p107 = scmp.ne.s32.totalorder %s93, %s94
      %p108 = scmp.eq.s32.totalorder %s22, 1
      %p109 = por %p107, %p108
      %p111 = scmp.ne.s32.totalorder %s94, %s110
      %p112 = scmp.eq.s32.totalorder %s22, 0
      %p113 = por %p111, %p112
      %s114 = ssub.s32 %s24, %s31
      %p115 = scmp.eq.s32.totalorder %s114, 0
      %s117 = sadd.s32 %s116, 1
      %s118 = scalar_select %p115, %s116, %s117
      %p121 = pneg %p115
      %p122 = scmp.eq.s32.totalorder %s16, 1
      %p123 = por %p121, %p122
      %p124 = scmp.ne.s32.totalorder %s116, %s119
      %p125 = scmp.eq.s32.totalorder %s16, 0
      %p126 = por %p124, %p125
      %p127 = scmp.ne.s32.totalorder %s116, %s119
      %p128 = scmp.eq.s32.totalorder %s21, 1
      %p129 = por %p127, %p128
      %p130 = scmp.ne.s32.totalorder %s119, %s120
      %p131 = scmp.eq.s32.totalorder %s21, 0
      %p132 = por %p130, %p131
      %p133 = scmp.ne.s32.totalorder %s119, %s120
      %p134 = scmp.eq.s32.totalorder %s22, 1
      %p135 = por %p133, %p134
      %p137 = scmp.ne.s32.totalorder %s120, %s136
      %p138 = scmp.eq.s32.totalorder %s22, 0
      %p139 = por %p137, %p138
      %s140 = ssub.s32 %s23, %s35
      %s141 = ssub.s32 %s24, %s31
      %s142 = sor.u32 %s140, %s141
      %p143 = scmp.eq.s32.totalorder %s142, 0
      %s145 = sadd.s32 %s144, 1
      %s146 = scalar_select %p143, %s144, %s145
      %p149 = pneg %p143
      %p150 = scmp.eq.s32.totalorder %s16, 1
      %p151 = por %p149, %p150
      %p152 = scmp.ne.s32.totalorder %s144, %s147
      %p153 = scmp.eq.s32.totalorder %s16, 0
      %p154 = por %p152, %p153
      %p155 = scmp.ne.s32.totalorder %s144, %s147
      %p156 = scmp.eq.s32.totalorder %s21, 1
      %p157 = por %p155, %p156
      %p158 = scmp.ne.s32.totalorder %s147, %s148
      %p159 = scmp.eq.s32.totalorder %s21, 0
      %p160 = por %p158, %p159
      %p161 = scmp.ne.s32.totalorder %s147, %s148
      %p162 = scmp.eq.s32.totalorder %s22, 1
      %p163 = por %p161, %p162
      %p165 = scmp.ne.s32.totalorder %s148, %s164
      %p166 = scmp.eq.s32.totalorder %s22, 0
      %p167 = por %p165, %p166
      %p168 = scmp.le.s32.totalorder 1, %s16
      %p169 = scmp.lt.s32.totalorder %s16, 3
      %p170 = pnand %p168, %p169
      %p171 = pneg %p170
      // Predicated region
      $region9: #{tpu_custom_call.1} parent=5 // pred_check
        _
      $region10: #{tpu_custom_call.1} parent=5 // pred_check_branch
        %173 = sbr.rel (%p170) target = $region12
      $region11: #{tpu_custom_call.1} parent=5 // pred_region
        %s174 = ssub.s32 %s16, 1
        // Predicated region
        $region13: #{tpu_custom_call.1} parent=11 // pred_check
          %p175 = pneg %p54
        $region14: #{tpu_custom_call.1} parent=11 // pred_check_branch
          %177 = sbr.rel (%p175) target = $region16
        $region15: #{tpu_custom_call.1} parent=11 // pred_region
          %p178 = scmp.lt.s32.totalorder %s25, 0
          %s179 = scalar_select %p178, %s25, 0
          %s180 = smul.addr %s179, 8
          %s181 = scalar_lea.vmem %s0, %s180
        $region16: #{tpu_custom_call.1} parent=11 // pred_fallthru
          _
        // Predicated region
        $region17: #{tpu_custom_call.1} parent=11 // pred_check
          %p182 = pneg %p80
        $region18: #{tpu_custom_call.1} parent=11 // pred_check_branch
          %184 = sbr.rel (%p182) target = $region20
        $region19: #{tpu_custom_call.1} parent=11 // pred_region
          %p185 = scmp.lt.s32.totalorder %s25, 0
          %s186 = scalar_select %p185, %s25, 0
          %s187 = smul.addr %s186, 8
          %s188 = scalar_lea.vmem %s1, %s187
        $region20: #{tpu_custom_call.1} parent=11 // pred_fallthru
          _
        // Predicated region
        $region21: #{tpu_custom_call.1} parent=11 // pred_check
          %p189 = pneg %p106
        $region22: #{tpu_custom_call.1} parent=11 // pred_check_branch
          %191 = sbr.rel (%p189) target = $region24
        $region23: #{tpu_custom_call.1} parent=11 // pred_region
          %p192 = scmp.lt.s32.totalorder %s25, 0
          %s193 = scalar_select %p192, %s25, 0
          %s194 = smul.addr %s193, 8
          %s195 = scalar_lea.vmem %s2, %s194
        $region24: #{tpu_custom_call.1} parent=11 // pred_fallthru
          _
      $region12: #{tpu_custom_call.1} parent=5 // pred_fallthru
        _
      %p196 = scmp.lt.s32.totalorder %s16, 2
      // Predicated region
      $region25: #{tpu_custom_call.1} parent=5 // pred_check
        %p197 = pneg %p196
      $region26: #{tpu_custom_call.1} parent=5 // pred_check_branch
        %199 = sbr.rel (%p197) target = $region28
      $region27: #{tpu_custom_call.1} parent=5 // pred_region
        // Predicated region
        $region29: #{tpu_custom_call.1} parent=27 // pred_check
          %p200 = pneg %p126
        $region30: #{tpu_custom_call.1} parent=27 // pred_check_branch
          %202 = sbr.rel (%p200) target = $region32
        $region31: #{tpu_custom_call.1} parent=27 // pred_region
          %s203 = sand.u32 %s116, 1
          %s204 = scalar_lea.sflag [#allocation3], %s203
          %s205 = sand.u32 %s116, 1
          %s206 = smul.addr %s205, 128
          %s207 = scalar_lea.vmem [#allocation2], %s206
          %s209 = ssub.s32 2048, 2048
          %210 = vsyncadd %s204, %s209
          %s211 = smul.addr %s24, 128
          %s212 = scalar_lea.hbm %s3, %s211
          %s213 = sshll.u32 %s207, 4
          %s214 = int_to_ptr.vmem [resolvable:$true] %s213
          %219 = dma.hbm_to_vmem [thread:$0]  %s212, 2048, %s214, %s204, 256, 128, 8
        $region32: #{tpu_custom_call.1} parent=27 // pred_fallthru
          _
      $region28: #{tpu_custom_call.1} parent=5 // pred_fallthru
        _
      %p220 = scmp.le.s32.totalorder 1, %s16
      %p221 = scmp.lt.s32.totalorder %s16, 3
      %p222 = pnand %p220, %p221
      %p223 = pneg %p222
      // Predicated region
      $region33: #{tpu_custom_call.1} parent=5 // pred_check
        _
      $region34: #{tpu_custom_call.1} parent=5 // pred_check_branch
        %225 = sbr.rel (%p222) target = $region36
      $region35: #{tpu_custom_call.1} parent=5 // pred_region
        %s226 = ssub.s32 %s16, 1
        %s227 = sand.u32 %s119, 1
        %s228 = scalar_lea.sflag [#allocation3], %s227
        %s229 = sand.u32 %s119, 1
        %s230 = smul.addr %s229, 128
        %s231 = scalar_lea.vmem [#allocation2], %s230
        // Predicated region
        $region37: #{tpu_custom_call.1} parent=35 // pred_check
          %p232 = pneg %p132
        $region38: #{tpu_custom_call.1} parent=35 // pred_check_branch
          %234 = sbr.rel (%p232) target = $region40
        $region39: #{tpu_custom_call.1} parent=35 // pred_region
          %235 = dma.done %s228, 2048
        $region40: #{tpu_custom_call.1} parent=35 // pred_fallthru
          _
        %p236 = scmp.lt.s32.totalorder %s25, 0
        %s237 = scalar_select %p236, %s25, 0
        %s238 = smul.addr %s237, 8
        %s239 = scalar_lea.vmem %s0, %s238
        %p240 = pneg %p54
        %p241 = pneg %p51
        %p242 = scmp.lt.s32.totalorder %s25, 0
        %s243 = scalar_select %p242, %s25, 0
        %s244 = smul.addr %s243, 8
        %s245 = scalar_lea.vmem %s1, %s244
        %p246 = pneg %p80
        %p247 = pneg %p77
        %p248 = scmp.lt.s32.totalorder %s25, 0
        %s249 = scalar_select %p248, %s25, 0
        %s250 = smul.addr %s249, 8
        %s251 = scalar_lea.vmem %s2, %s250
        %p252 = pneg %p106
        %p253 = pneg %p103
        %s254 = sand.u32 %s119, 1
        %s255 = scalar_lea.sflag [#allocation3], %s254
        %s256 = sand.u32 %s119, 1
        %s257 = smul.addr %s256, 128
        %s258 = scalar_lea.vmem [#allocation2], %s257
        %p259 = pneg %p132
        %p260 = pneg %p129
        %p261 = pneg %p160
        %p262 = pneg %p157
        %s263 = sand.u32 %s147, 1
        %s264 = scalar_lea.sflag [#allocation4], %s263
        %s265 = sand.u32 %s147, 1
        %s266 = smul.addr %s265, 8
        %s267 = scalar_lea.vmem [#allocation5], %s266
        %p268 = scmp.lt.s32.totalorder %s25, 0
        %s269 = scalar_select %p268, %s25, 0
        %s270 = smul.addr %s269, 8
        %s271 = scalar_lea.vmem %s0, %s270
        %p272 = scmp.lt.s32.totalorder %s25, 0
        %s273 = scalar_select %p272, %s25, 0
        %s274 = smul.addr %s273, 8
        %s275 = scalar_lea.vmem %s1, %s274
        %p276 = scmp.lt.s32.totalorder %s25, 0
        %s277 = scalar_select %p276, %s25, 0
        %s278 = smul.addr %s277, 8
        %s279 = scalar_lea.vmem %s2, %s278
        %v280 = vld [vmem:[%s279] sm:$0xff]
        %v281 = vld [vmem:[%s231] sm:$0xff]
        %v282 = vld [vmem:[%s231 + $0x8] sm:$0xff]
        %v283 = vld [vmem:[%s231 + $0x10] sm:$0xff]
        %v284 = vld [vmem:[%s231 + $0x18] sm:$0xff]
        %v285 = vld [vmem:[%s231 + $0x20] sm:$0xff]
        %v286 = vld [vmem:[%s231 + $0x28] sm:$0xff]
        %v287 = vld [vmem:[%s231 + $0x30] sm:$0xff]
        %v288 = vld [vmem:[%s231 + $0x38] sm:$0xff]
        %v289 = vld [vmem:[%s231 + $0x40] sm:$0xff]
        %v290 = vld [vmem:[%s231 + $0x48] sm:$0xff]
        %v291 = vld [vmem:[%s231 + $0x50] sm:$0xff]
        %v292 = vld [vmem:[%s231 + $0x58] sm:$0xff]
        %v293 = vld [vmem:[%s231 + $0x60] sm:$0xff]
        %v294 = vld [vmem:[%s231 + $0x68] sm:$0xff]
        %v295 = vld [vmem:[%s231 + $0x70] sm:$0xff]
        %v296 = vld [vmem:[%s231 + $0x78] sm:$0xff]
        %297 = vmatprep.subr.mxu0 0.0
        %298 = vmatpush1.msra.mxu0 %v296
        %299 = vmatprep.subr.mxu0 0.0
        %300 = vmatpush1.msra.mxu0 %v295
        %301 = vmatprep.subr.mxu0 0.0
        %302 = vmatpush1.msra.mxu0 %v294
        %303 = vmatprep.subr.mxu0 0.0
        %304 = vmatpush1.msra.mxu0 %v293
        %305 = vmatprep.subr.mxu0 0.0
        %306 = vmatpush1.msra.mxu0 %v292
        %307 = vmatprep.subr.mxu0 0.0
        %308 = vmatpush1.msra.mxu0 %v291
        %309 = vmatprep.subr.mxu0 0.0
        %310 = vmatpush1.msra.mxu0 %v290
        %311 = vmatprep.subr.mxu0 0.0
        %312 = vmatpush1.msra.mxu0 %v289
        %313 = vmatprep.subr.mxu0 0.0
        %314 = vmatpush1.msra.mxu0 %v288
        %315 = vmatprep.subr.mxu0 0.0
        %316 = vmatpush1.msra.mxu0 %v287
        %317 = vmatprep.subr.mxu0 0.0
        %318 = vmatpush1.msra.mxu0 %v286
        %319 = vmatprep.subr.mxu0 0.0
        %320 = vmatpush1.msra.mxu0 %v285
        %321 = vmatprep.subr.mxu0 0.0
        %322 = vmatpush1.msra.mxu0 %v284
        %323 = vmatprep.subr.mxu0 0.0
        %324 = vmatpush1.msra.mxu0 %v283
        %325 = vmatprep.subr.mxu0 0.0
        %326 = vmatpush1.msra.mxu0 %v282
        %327 = vmatprep.subr.mxu0 0.0
        %328 = vmatpush1.msra.mxu0 %v281
        %329 = vmatprep.subr.mxu0 0.0
        %330 = vmatpush2.msra.mxu0 0.0
        %331 = vmatprep.subr.mxu0 0.0
        %332 = vmatpush2.msra.mxu0 0.0
        %333 = vmatprep.subr.mxu0 0.0
        %334 = vmatpush2.msra.mxu0 0.0
        %335 = vmatprep.subr.mxu0 0.0
        %336 = vmatpush2.msra.mxu0 0.0
        %337 = vmatprep.subr.mxu0 0.0
        %338 = vmatpush2.msra.mxu0 0.0
        %339 = vmatprep.subr.mxu0 0.0
        %340 = vmatpush2.msra.mxu0 0.0
        %341 = vmatprep.subr.mxu0 0.0
        %342 = vmatpush2.msra.mxu0 0.0
        %343 = vmatprep.subr.mxu0 0.0
        %344 = vmatpush2.msra.mxu0 0.0
        %345 = vmatprep.subr.mxu0 0.0
        %346 = vmatpush2.msra.mxu0 0.0
        %347 = vmatprep.subr.mxu0 0.0
        %348 = vmatpush2.msra.mxu0 0.0
        %349 = vmatprep.subr.mxu0 0.0
        %350 = vmatpush2.msra.mxu0 0.0
        %351 = vmatprep.subr.mxu0 0.0
        %352 = vmatpush2.msra.mxu0 0.0
        %353 = vmatprep.subr.mxu0 0.0
        %354 = vmatpush2.msra.mxu0 0.0
        %355 = vmatprep.subr.mxu0 0.0
        %356 = vmatpush2.msra.mxu0 0.0
        %357 = vmatprep.subr.mxu0 0.0
        %358 = vmatpush2.msra.mxu0 0.0
        %359 = vmatprep.subr.mxu0 0.0
        %360 = vmatpush2.msra.mxu0 0.0
        %361 = vmatprep.mubr.f32.mxu0 0.0
        %362 = vmatmul.mubr.f32.gmra.mxu0 %v280
        %v363 = vpop.f32.mrf.mxu0
        %v364 = vadd.f32 0.0, %v363
        %v365 = vpop.f32.mrf.mxu0
        %366 = vdwg.mxu0
        %v367 = vmax.f32 %v364, -1.0
        %v368 = vmin.f32 %v367, 1.0
        %v369 = vld [vmem:[%s271] sm:$0xff]
        %s370 = smul.u32 %s26, 128
        %v371 = vstv %s370
        %v372 = vsub.s32 %v369, %v371
        %v373 = vlaneseq
        %v374 = vand.u32 %v373, 127
        %375 = vset.pattern.permute.xlu0 0
        %376 = vperm.xlu0 %375, %v372
        %v377 = vpop.permute.xlu0 %376
        %vm378 = vcmp.eq.s32.totalorder %v374, %v377
        %v379 = vld [vmem:[%s275] sm:$0xff]
        %381 = vset.pattern.permute.xlu0 0
        %382 = vperm.xlu0 %381, %v379
        %v383 = vpop.permute.xlu0 %382
        %v385 = vsel %vm378, %v383, 0.0
        %v386 = vsub.f32 %v368, %v385
        %v387 = vmul.f32 %v386, 30.0
        %388 = vst [vmem:[%s267] sm:$0xff] %v387
        %s389 = sand.u32 %s147, 1
        %s390 = scalar_lea.sflag [#allocation4], %s389
        %s391 = sand.u32 %s147, 1
        %s392 = smul.addr %s391, 8
        %s393 = scalar_lea.vmem [#allocation5], %s392
        // Predicated region
        $region41: #{tpu_custom_call.1} parent=35 // pred_check
          %p394 = pneg %p157
        $region42: #{tpu_custom_call.1} parent=35 // pred_check_branch
          %396 = sbr.rel (%p394) target = $region44
        $region43: #{tpu_custom_call.1} parent=35 // pred_region
          %s398 = ssub.s32 128, 128
          %399 = vsyncadd %s390, %s398
          %s400 = smul.addr %s25, 2
          %s401 = sadd.s32 %s26, %s400
          %s402 = smul.addr %s401, 128
          %s403 = scalar_lea.hbm %s4, %s402
          %s405 = sshll.u32 %s393, 4
          %s406 = int_to_ptr.vmem [resolvable:$true] %s405
          %408 = dma.vmem_to_hbm [thread:$0]  %s406, 128, %s403, %s390
        $region44: #{tpu_custom_call.1} parent=35 // pred_fallthru
          _
      $region36: #{tpu_custom_call.1} parent=5 // pred_fallthru
        _
      %p409 = scmp.le.s32.totalorder 2, %s16
      // Predicated region
      $region45: #{tpu_custom_call.1} parent=5 // pred_check
        %p410 = pneg %p409
      $region46: #{tpu_custom_call.1} parent=5 // pred_check_branch
        %412 = sbr.rel (%p410) target = $region48
      $region47: #{tpu_custom_call.1} parent=5 // pred_region
        %s413 = ssub.s32 %s16, 2
        // Predicated region
        $region49: #{tpu_custom_call.1} parent=47 // pred_check
          %p414 = pneg %p163
        $region50: #{tpu_custom_call.1} parent=47 // pred_check_branch
          %416 = sbr.rel (%p414) target = $region52
        $region51: #{tpu_custom_call.1} parent=47 // pred_region
          %s417 = sand.u32 %s148, 1
          %s418 = scalar_lea.sflag [#allocation4], %s417
          %s419 = sand.u32 %s148, 1
          %s420 = smul.addr %s419, 8
          %s421 = scalar_lea.vmem [#allocation5], %s420
          %422 = dma.done %s418, 128
        $region52: #{tpu_custom_call.1} parent=47 // pred_fallthru
          _
      $region48: #{tpu_custom_call.1} parent=5 // pred_fallthru
        _
    $region6: #{tpu_custom_call.1} parent=1 // loop_footer
      %s20 = sadd.s32 1, %s16
    $region7: #{tpu_custom_call.1} parent=1 // loop_footer_branch
      %15 = sbr.rel target = $region3
    $region8: #{tpu_custom_call.1} parent=1 // loop_exit
      _
    %423 = vsyncpa [#allocation3], 1
    %s424 = scalar_lea.sflag [#allocation3], 1
    %425 = vsyncpa %s424, 1
    %426 = vsyncpa [#allocation4], 1
    %s427 = scalar_lea.sflag [#allocation4], 1
    %428 = vsyncpa %s427, 1

</llo_original>
